<compile_context>
chip_gen: v6e
topology: v6e:2x2x1
jax: 0.10.0
libtpu: 0.0.40
codegen_flags: <defaults>
</compile_context>

<pallas_src>
import types

import jax
import jax.numpy as jnp
from jax import lax
from jax.experimental import pallas as pl
from jax.experimental.pallas import tpu as pltpu


# ----------------------------- Pallas kernel --------------------------------

def _make_detr_kernel(L, B, Q, C, NT, Npad):
    """Fused per-(layer, image) loss kernel. Grid = (L, B); B is the accumulation axis."""
    no_obj = C - 1

    def kernel(tlen_ref, src_ref, lab_ref,                 # scalar-prefetch tables (SMEM)
               logits_ref, w_ref, sbox_ref, tbox_ref, mask_ref,   # VMEM blocks
               out_ref,                                    # (1, 1, 8) VMEM output block
               acc_ref):                                   # (8,) SMEM scratch accumulators
        l = pl.program_id(0)
        b = pl.program_id(1)

        # ---- per-layer init: zero accumulators, compute box L1/GIoU once per layer ----
        @pl.when(b == 0)
        def _init():
            for i in range(8):
                acc_ref[i] = 0.0
            eps = 1e-7
            s = sbox_ref[0]           # (4, Npad) lane-dense rows: cx, cy, w, h
            t = tbox_ref[...]         # (4, Npad)
            msk = mask_ref[...]       # (1, Npad) validity mask for padded columns
            acc_ref[5] = jnp.sum(jnp.abs(s - t) * msk)

            scx, scy, sw, sh = s[0:1], s[1:2], s[2:3], s[3:4]
            tcx, tcy, tw, th = t[0:1], t[1:2], t[2:3], t[3:4]
            sx1, sy1 = scx - 0.5 * sw, scy - 0.5 * sh
            sx2, sy2 = scx + 0.5 * sw, scy + 0.5 * sh
            tx1, ty1 = tcx - 0.5 * tw, tcy - 0.5 * th
            tx2, ty2 = tcx + 0.5 * tw, tcy + 0.5 * th
            iw = jnp.maximum(jnp.minimum(sx2, tx2) - jnp.maximum(sx1, tx1), 0.0)
            ih = jnp.maximum(jnp.minimum(sy2, ty2) - jnp.maximum(sy1, ty1), 0.0)
            inter = iw * ih
            union = (sx2 - sx1) * (sy2 - sy1) + (tx2 - tx1) * (ty2 - ty1) - inter + eps
            iou = inter * pl.reciprocal(union, approx=True)
            cw = jnp.maximum(sx2, tx2) - jnp.minimum(sx1, tx1)
            ch = jnp.maximum(sy2, ty2) - jnp.minimum(sy1, ty1)
            c_area = cw * ch + eps
            giou = iou - (c_area - union) * pl.reciprocal(c_area, approx=True)
            acc_ref[6] = jnp.sum((1.0 - giou) * msk)

        # ---- per-image classification / cardinality partial sums ----
        logits = logits_ref[0, 0].astype(jnp.float32)                     # (Q, C)
        class_ids = lax.broadcasted_iota(jnp.int32, (Q, C), 1)
        q_iota = lax.broadcasted_iota(jnp.int32, (Q, 1), 0)

        # target class per query (reference's target_classes scatter) built from SMEM
        # matched indices; unmatched queries get the no-object class.
        tgt = jnp.full((Q, 1), no_obj, dtype=jnp.int32)
        row = l * B + b
        for j in range(NT):
            tgt = jnp.where(q_iota == src_ref[row, j], lab_ref[b, j], tgt)

        eq = class_ids == tgt                                             # (Q, C)
        m = jnp.max(logits, axis=-1, keepdims=True)                       # reused below
        lse = jnp.log(jnp.sum(jnp.exp(logits - m), axis=-1, keepdims=True)) + m
        nll = jnp.sum(jnp.where(eq, lse - logits, 0.0), axis=-1, keepdims=True)   # (Q,1)
        w_t = jnp.sum(jnp.where(eq, w_ref[...], 0.0), axis=-1, keepdims=True)     # (Q,1)

        # first-max-index argmax over classes (reuses m; no second max reduction)
        amax = jnp.min(jnp.where(logits >= m, class_ids, C), axis=-1, keepdims=True)
        not_empty = (amax != no_obj).astype(jnp.float32)
        matched = (tgt != no_obj).astype(jnp.float32)
        correct = matched * (amax == tgt).astype(jnp.float32)

        acc_ref[0] += jnp.sum(w_t * nll)                                  # CE numerator
        acc_ref[1] += jnp.sum(w_t)                                        # CE denominator
        acc_ref[2] += jnp.abs(jnp.sum(not_empty) - tlen_ref[b].astype(jnp.float32))
        acc_ref[3] += jnp.sum(correct)
        acc_ref[4] += jnp.sum(matched)

        # ---- per-layer finalize: one lane row [ce, card, cls_err, l1, giou, 0, 0, 0] ----
        @pl.when(b == B - 1)
        def _fin():
            loss_ce = acc_ref[0] / acc_ref[1]
            card_err = acc_ref[2] * (1.0 / B)
            class_err = 100.0 - 100.0 * acc_ref[3] / jnp.maximum(acc_ref[4], 1.0)
            slot = lax.broadcasted_iota(jnp.int32, (1, 1, 8), 2)
            row_out = jnp.where(slot == 0, loss_ce, 0.0)
            row_out = row_out + jnp.where(slot == 1, card_err, 0.0)
            row_out = row_out + jnp.where(slot == 2, class_err, 0.0)
            row_out = row_out + jnp.where(slot == 3, acc_ref[5], 0.0)
            row_out = row_out + jnp.where(slot == 4, acc_ref[6], 0.0)
            out_ref[...] = row_out

    return kernel


def _run_fused_loss(logits_all, w_row, tlens, src_idx_2d, labels_2d,
                    sboxes, tboxes, bmask):
    """One gridded pallas_call over (layers, batch) producing (L, 8) raw loss terms."""
    L, B, Q, C = logits_all.shape
    NT = labels_2d.shape[1]
    Npad = sboxes.shape[-1]
    kernel = _make_detr_kernel(L, B, Q, C, NT, Npad)

    grid_spec = pltpu.PrefetchScalarGridSpec(
        num_scalar_prefetch=3,                       # tlens, src_idx, labels -> SMEM
        grid=(L, B),
        in_specs=[
            pl.BlockSpec((1, 1, Q, C), lambda l, b, *_: (l, b, 0, 0)),   # logits
            pl.BlockSpec((1, C), lambda l, b, *_: (0, 0)),               # empty_weight
            pl.BlockSpec((1, 4, Npad), lambda l, b, *_: (l, 0, 0)),      # matched src boxes
            pl.BlockSpec((4, Npad), lambda l, b, *_: (0, 0)),            # target boxes
            pl.BlockSpec((1, Npad), lambda l, b, *_: (0, 0)),            # valid-column mask
        ],
        out_specs=pl.BlockSpec((1, 1, 8), lambda l, b, *_: (l, 0, 0)),
        scratch_shapes=[pltpu.SMEM((8,), jnp.float32)],
    )
    out = pl.pallas_call(
        kernel,
        out_shape=jax.ShapeDtypeStruct((L, 1, 8), jnp.float32),
        grid_spec=grid_spec,
        compiler_params=pltpu.CompilerParams(
            dimension_semantics=("parallel", "arbitrary"),
            vmem_limit_bytes=64 * 1024 * 1024),
    )(tlens, src_idx_2d, labels_2d, logits_all, w_row, sboxes, tboxes, bmask)
    return out[:, 0, :]                              # (L, 8)


# ------------------------------ JAX glue -------------------------------------

def _greedy_matcher(logits_all, boxes_all, labels, gt_boxes,
                    cost_class=1.0, cost_bbox=5.0):
    # TODO(synk): exact Hungarian assignment (scipy.linear_sum_assignment) has no clean
    # JAX/Pallas equivalent; a deterministic, vectorized greedy matcher is used instead.
    L, B, Q, C = logits_all.shape
    NT = labels.shape[1]
    probs = jax.nn.softmax(logits_all.astype(jnp.float32), axis=-1)           # (L,B,Q,C)
    onehot = jax.nn.one_hot(labels, C, dtype=jnp.float32)                     # (B,NT,C)
    c_cls = -jnp.einsum('lbqc,bnc->lbqn', probs, onehot)                      # MXU matmul
    c_l1 = jnp.sum(jnp.abs(boxes_all[:, :, :, None, :].astype(jnp.float32)
                           - gt_boxes[None, :, None, :, :].astype(jnp.float32)),
                   axis=-1)                                                   # (L,B,Q,NT)
    cost = cost_class * c_cls + cost_bbox * c_l1

    def assign_one(cost_qn):                                                  # (Q, NT)
        def body(j, carry):
            assigned, picks = carry
            col = lax.dynamic_index_in_dim(cost_qn, j, axis=1, keepdims=False)
            q = jnp.argmin(jnp.where(assigned, jnp.inf, col)).astype(jnp.int32)
            return assigned.at[q].set(True), picks.at[j].set(q)
        init = (jnp.zeros((Q,), jnp.bool_), jnp.zeros((NT,), jnp.int32))
        return lax.fori_loop(0, NT, body, init)[1]

    return jax.vmap(jax.vmap(assign_one))(cost)                               # (L,B,NT)


@jax.jit
def _detr_losses_all_layers(logits_all, boxes_all, labels, gt_boxes, empty_weight,
                            cls_w, box_w, giou_w, num_boxes):
    L, B, Q, C = logits_all.shape
    NT = labels.shape[1]
    N = B * NT
    Npad = ((N + 127) // 128) * 128

    src_idx = _greedy_matcher(logits_all, boxes_all, labels, gt_boxes)        # (L,B,NT)

    # gather matched predicted boxes per layer and relayout lane-dense as (4, Npad)
    gather_idx = jnp.broadcast_to(src_idx[..., None], (L, B, NT, 4))
    src_boxes = jnp.take_along_axis(boxes_all.astype(jnp.float32), gather_idx, axis=2)
    sboxes = jnp.transpose(src_boxes.reshape(L, N, 4), (0, 2, 1))             # (L,4,N)
    sboxes = jnp.pad(sboxes, ((0, 0), (0, 0), (0, Npad - N)))
    tboxes = jnp.transpose(gt_boxes.astype(jnp.float32).reshape(N, 4), (1, 0))
    tboxes = jnp.pad(tboxes, ((0, 0), (0, Npad - N)))
    bmask = jnp.pad(jnp.ones((1, N), jnp.float32), ((0, 0), (0, Npad - N)))

    # TODO(synk): per-image valid-target counts / distributed all-reduce of num_boxes
    # are not modeled; every image is assumed to carry exactly NT real boxes.
    tlens = jnp.full((B,), NT, dtype=jnp.int32)
    src_idx_2d = src_idx.reshape(L * B, NT).astype(jnp.int32)
    labels_2d = labels.astype(jnp.int32)
    w_row = empty_weight.reshape(1, C).astype(jnp.float32)

    per_layer = _run_fused_loss(logits_all.astype(jnp.float32), w_row, tlens,
                                src_idx_2d, labels_2d, sboxes, tboxes, bmask)  # (L,8)

    inv_nb = 1.0 / num_boxes
    scaled = jnp.stack([per_layer[:, 0] * cls_w,                # loss_ce
                        per_layer[:, 1],                        # cardinality_error
                        per_layer[:, 2],                        # class_error
                        per_layer[:, 3] * (box_w * inv_nb),     # loss_bbox
                        per_layer[:, 4] * (giou_w * inv_nb)],   # loss_giou
                       axis=1)                                  # (L, 5)
    # The reference forward sums *every* dict entry, including cardinality_error of
    # all layers and class_error of the main layer (aux layers are log=False).
    total = jnp.sum(scaled[:, 0] + scaled[:, 1] + scaled[:, 3] + scaled[:, 4]) + scaled[0, 2]
    return scaled, total


class DETRLossPallas:
    """JAX/Pallas re-implementation of DETRLoss.forward."""

    def __init__(self, nc, hyp):
        self.nc = nc
        self.hyp = hyp
        # empty_weight buffer: ones(nc+1) with last entry = eos_coef
        self.empty_weight = jnp.ones((nc + 1,), jnp.float32).at[-1].set(hyp.eos_coef)

    def __call__(self, outputs, targets):
        labels = targets['labels']        # (B, NT) int32
        gt_boxes = targets['boxes']       # (B, NT, 4) float32
        B, NT = labels.shape
        num_boxes = max(float(B * NT), 1.0)

        layers = [outputs] + list(outputs.get('aux_outputs', []))
        logits_all = jnp.stack([lyr['pred_logits'] for lyr in layers], axis=0)  # (L,B,Q,C)
        boxes_all = jnp.stack([lyr['pred_boxes'] for lyr in layers], axis=0)    # (L,B,Q,4)
        L = logits_all.shape[0]

        scaled, total = _detr_losses_all_layers(
            logits_all, boxes_all, labels, gt_boxes, self.empty_weight,
            float(self.hyp.cls), float(self.hyp.box), float(self.hyp.giou),
            float(num_boxes))

        total_loss = {}
        for i in range(L):
            sfx = '' if i == 0 else f'_{i - 1}'
            total_loss['loss_ce' + sfx] = scaled[i, 0]
            if i == 0:
                total_loss['class_error'] = scaled[0, 2]
            total_loss['cardinality_error' + sfx] = scaled[i, 1]
            total_loss['loss_bbox' + sfx] = scaled[i, 3]
            total_loss['loss_giou' + sfx] = scaled[i, 4]
        return total, total_loss


# ------------------------------ example run ----------------------------------

if __name__ == "__main__":
    key = jax.random.PRNGKey(0)
    B, Q, nc, NT = 2, 16, 20, 4
    C = nc + 1
    k1, k2, k3, k4, k5, k6, k7 = jax.random.split(key, 7)

    hyp = types.SimpleNamespace(cls=1.0, box=5.0, giou=2.0, eos_coef=0.1)

    pred_logits = jax.random.normal(k1, (B, Q, C), jnp.float32)
    pred_boxes = jax.nn.sigmoid(jax.random.normal(k2, (B, Q, 4), jnp.float32))
    aux_logits = jax.random.normal(k3, (B, Q, C), jnp.float32)
    aux_boxes = jax.nn.sigmoid(jax.random.normal(k4, (B, Q, 4), jnp.float32))

    labels = jax.random.randint(k5, (B, NT), 0, nc, dtype=jnp.int32)
    cxcy = jax.random.uniform(k6, (B, NT, 2), jnp.float32, 0.2, 0.8)
    wh = jax.random.uniform(k7, (B, NT, 2), jnp.float32, 0.05, 0.3)
    boxes = jnp.concatenate([cxcy, wh], axis=-1)

    outputs = {
        'pred_logits': pred_logits,
        'pred_boxes': pred_boxes,
        'aux_outputs': [{'pred_logits': aux_logits, 'pred_boxes': aux_boxes}],
    }
    targets = {'labels': labels, 'boxes': boxes}

    criterion = DETRLossPallas(nc=nc, hyp=hyp)
    loss, loss_dict = criterion(outputs, targets)
    loss = jax.block_until_ready(loss)
    jax.block_until_ready(loss_dict)
    print("KERNEL_OK")
</pallas_src>

<mosaic_0001>
module attributes {stable_mosaic.version = 11 : i64} {
  func.func @kernel(%arg0: i32, %arg1: i32, %arg2: memref<2xi32, #tpu.memory_space<smem>>, %arg3: memref<4x4xi32, #tpu.memory_space<smem>>, %arg4: memref<2x4xi32, #tpu.memory_space<smem>>, %arg5: memref<1x1x16x21xf32, #tpu.memory_space<vmem>>, %arg6: memref<1x21xf32, #tpu.memory_space<vmem>>, %arg7: memref<1x4x128xf32, #tpu.memory_space<vmem>>, %arg8: memref<4x128xf32, #tpu.memory_space<vmem>>, %arg9: memref<1x128xf32, #tpu.memory_space<vmem>>, %arg10: memref<1x1x8xf32, #tpu.memory_space<vmem>>, %arg11: memref<8xf32, #tpu.memory_space<smem>>) attributes {dimension_semantics = [#tpu.dimension_semantics<parallel>, #tpu.dimension_semantics<arbitrary>], iteration_bounds = array<i64: 2, 2>, scalar_prefetch = 3 : i64, scratch_operands = 1 : i64, tpu.core_type = #tpu.core_type<tc>, window_params = [{transform_indices = @transform_0, window_bounds = array<i64: 1, 1, 16, 21>}, {pipeline_mode = #tpu.pipeline_mode<synchronous>, transform_indices = @transform_1, window_bounds = array<i64: 1, 21>}, {transform_indices = @transform_2, window_bounds = array<i64: 1, 4, 128>}, {pipeline_mode = #tpu.pipeline_mode<synchronous>, transform_indices = @transform_3, window_bounds = array<i64: 4, 128>}, {pipeline_mode = #tpu.pipeline_mode<synchronous>, transform_indices = @transform_4, window_bounds = array<i64: 1, 128>}, {transform_indices = @transform_5, window_bounds = array<i64: 1, 1, 8>}]} {
    %c0_i32 = arith.constant 0 : i32
    %0 = arith.cmpi eq, %arg1, %c0_i32 : i32
    %1 = arith.extui %0 : i1 to i32
    %c0_i32_0 = arith.constant 0 : i32
    %2 = arith.cmpi ne, %1, %c0_i32_0 : i32
    scf.if %2 {
      %cst_34 = arith.constant 0.000000e+00 : f32
      %c0_35 = arith.constant 0 : index
      %128 = memref.load %arg11[%c0_35] : memref<8xf32, #tpu.memory_space<smem>>
      memref.store %cst_34, %arg11[%c0_35] : memref<8xf32, #tpu.memory_space<smem>>
      %cst_36 = arith.constant 0.000000e+00 : f32
      %c1_37 = arith.constant 1 : index
      %129 = memref.load %arg11[%c1_37] : memref<8xf32, #tpu.memory_space<smem>>
      memref.store %cst_36, %arg11[%c1_37] : memref<8xf32, #tpu.memory_space<smem>>
      %cst_38 = arith.constant 0.000000e+00 : f32
      %c2_39 = arith.constant 2 : index
      %130 = memref.load %arg11[%c2_39] : memref<8xf32, #tpu.memory_space<smem>>
      memref.store %cst_38, %arg11[%c2_39] : memref<8xf32, #tpu.memory_space<smem>>
      %cst_40 = arith.constant 0.000000e+00 : f32
      %c3_41 = arith.constant 3 : index
      %131 = memref.load %arg11[%c3_41] : memref<8xf32, #tpu.memory_space<smem>>
      memref.store %cst_40, %arg11[%c3_41] : memref<8xf32, #tpu.memory_space<smem>>
      %cst_42 = arith.constant 0.000000e+00 : f32
      %c4_43 = arith.constant 4 : index
      %132 = memref.load %arg11[%c4_43] : memref<8xf32, #tpu.memory_space<smem>>
      memref.store %cst_42, %arg11[%c4_43] : memref<8xf32, #tpu.memory_space<smem>>
      %cst_44 = arith.constant 0.000000e+00 : f32
      %c5 = arith.constant 5 : index
      %133 = memref.load %arg11[%c5] : memref<8xf32, #tpu.memory_space<smem>>
      memref.store %cst_44, %arg11[%c5] : memref<8xf32, #tpu.memory_space<smem>>
      %cst_45 = arith.constant 0.000000e+00 : f32
      %c6 = arith.constant 6 : index
      %134 = memref.load %arg11[%c6] : memref<8xf32, #tpu.memory_space<smem>>
      memref.store %cst_45, %arg11[%c6] : memref<8xf32, #tpu.memory_space<smem>>
      %cst_46 = arith.constant 0.000000e+00 : f32
      %c7 = arith.constant 7 : index
      %135 = memref.load %arg11[%c7] : memref<8xf32, #tpu.memory_space<smem>>
      memref.store %cst_46, %arg11[%c7] : memref<8xf32, #tpu.memory_space<smem>>
      %c0_47 = arith.constant 0 : index
      %c0_48 = arith.constant 0 : index
      %c0_49 = arith.constant 0 : index
      %136 = vector.load %arg7[%c0_47, %c0_48, %c0_49] : memref<1x4x128xf32, #tpu.memory_space<vmem>>, vector<1x4x128xf32>
      %137 = vector.shape_cast %136 : vector<1x4x128xf32> to vector<4x128xf32>
      %c0_50 = arith.constant 0 : index
      %c0_51 = arith.constant 0 : index
      %138 = vector.load %arg8[%c0_50, %c0_51] : memref<4x128xf32, #tpu.memory_space<vmem>>, vector<4x128xf32>
      %c0_52 = arith.constant 0 : index
      %c0_53 = arith.constant 0 : index
      %139 = vector.load %arg9[%c0_52, %c0_53] : memref<1x128xf32, #tpu.memory_space<vmem>>, vector<1x128xf32>
      %140 = arith.subf %137, %138 : vector<4x128xf32>
      %141 = math.absf %140 : vector<4x128xf32>
      %142 = vector.broadcast %139 : vector<1x128xf32> to vector<4x128xf32>
      %143 = arith.mulf %141, %142 : vector<4x128xf32>
      %144 = vector.shape_cast %143 : vector<4x128xf32> to vector<1x4x128xf32>
      %cst_54 = arith.constant dense<0.000000e+00> : vector<1xf32>
      %145 = vector.multi_reduction <add>, %144, %cst_54 [1, 2] : vector<1x4x128xf32> to vector<1xf32>
      %146 = vector.shape_cast %145 : vector<1xf32> to vector<1x1x1xf32>
      %147 = vector.extract %146[0, 0, 0] : f32 from vector<1x1x1xf32>
      %c5_55 = arith.constant 5 : index
      %148 = memref.load %arg11[%c5_55] : memref<8xf32, #tpu.memory_space<smem>>
      memref.store %147, %arg11[%c5_55] : memref<8xf32, #tpu.memory_space<smem>>
      %149 = vector.extract_strided_slice %137 {offsets = [0, 0], sizes = [1, 128], strides = [1, 1]} : vector<4x128xf32> to vector<1x128xf32>
      %150 = vector.extract_strided_slice %137 {offsets = [1, 0], sizes = [1, 128], strides = [1, 1]} : vector<4x128xf32> to vector<1x128xf32>
      %151 = vector.extract_strided_slice %137 {offsets = [2, 0], sizes = [1, 128], strides = [1, 1]} : vector<4x128xf32> to vector<1x128xf32>
      %152 = vector.extract_strided_slice %137 {offsets = [3, 0], sizes = [1, 128], strides = [1, 1]} : vector<4x128xf32> to vector<1x128xf32>
      %153 = vector.extract_strided_slice %138 {offsets = [0, 0], sizes = [1, 128], strides = [1, 1]} : vector<4x128xf32> to vector<1x128xf32>
      %154 = vector.extract_strided_slice %138 {offsets = [1, 0], sizes = [1, 128], strides = [1, 1]} : vector<4x128xf32> to vector<1x128xf32>
      %155 = vector.extract_strided_slice %138 {offsets = [2, 0], sizes = [1, 128], strides = [1, 1]} : vector<4x128xf32> to vector<1x128xf32>
      %156 = vector.extract_strided_slice %138 {offsets = [3, 0], sizes = [1, 128], strides = [1, 1]} : vector<4x128xf32> to vector<1x128xf32>
      %cst_56 = arith.constant 5.000000e-01 : f32
      %157 = vector.broadcast %cst_56 : f32 to vector<1x128xf32>
      %158 = arith.mulf %157, %151 : vector<1x128xf32>
      %159 = arith.subf %149, %158 : vector<1x128xf32>
      %cst_57 = arith.constant 5.000000e-01 : f32
      %160 = vector.broadcast %cst_57 : f32 to vector<1x128xf32>
      %161 = arith.mulf %160, %152 : vector<1x128xf32>
      %162 = arith.subf %150, %161 : vector<1x128xf32>
      %cst_58 = arith.constant 5.000000e-01 : f32
      %163 = vector.broadcast %cst_58 : f32 to vector<1x128xf32>
      %164 = arith.mulf %163, %151 : vector<1x128xf32>
      %165 = arith.addf %149, %164 : vector<1x128xf32>
      %cst_59 = arith.constant 5.000000e-01 : f32
      %166 = vector.broadcast %cst_59 : f32 to vector<1x128xf32>
      %167 = arith.mulf %166, %152 : vector<1x128xf32>
      %168 = arith.addf %150, %167 : vector<1x128xf32>
      %cst_60 = arith.constant 5.000000e-01 : f32
      %169 = vector.broadcast %cst_60 : f32 to vector<1x128xf32>
      %170 = arith.mulf %169, %155 : vector<1x128xf32>
      %171 = arith.subf %153, %170 : vector<1x128xf32>
      %cst_61 = arith.constant 5.000000e-01 : f32
      %172 = vector.broadcast %cst_61 : f32 to vector<1x128xf32>
      %173 = arith.mulf %172, %156 : vector<1x128xf32>
      %174 = arith.subf %154, %173 : vector<1x128xf32>
      %cst_62 = arith.constant 5.000000e-01 : f32
      %175 = vector.broadcast %cst_62 : f32 to vector<1x128xf32>
      %176 = arith.mulf %175, %155 : vector<1x128xf32>
      %177 = arith.addf %153, %176 : vector<1x128xf32>
      %cst_63 = arith.constant 5.000000e-01 : f32
      %178 = vector.broadcast %cst_63 : f32 to vector<1x128xf32>
      %179 = arith.mulf %178, %156 : vector<1x128xf32>
      %180 = arith.addf %154, %179 : vector<1x128xf32>
      %181 = arith.minimumf %165, %177 : vector<1x128xf32>
      %182 = arith.maximumf %159, %171 : vector<1x128xf32>
      %183 = arith.subf %181, %182 : vector<1x128xf32>
      %cst_64 = arith.constant 0.000000e+00 : f32
      %184 = vector.broadcast %cst_64 : f32 to vector<1x128xf32>
      %185 = arith.maximumf %183, %184 : vector<1x128xf32>
      %186 = arith.minimumf %168, %180 : vector<1x128xf32>
      %187 = arith.maximumf %162, %174 : vector<1x128xf32>
      %188 = arith.subf %186, %187 : vector<1x128xf32>
      %cst_65 = arith.constant 0.000000e+00 : f32
      %189 = vector.broadcast %cst_65 : f32 to vector<1x128xf32>
      %190 = arith.maximumf %188, %189 : vector<1x128xf32>
      %191 = arith.mulf %185, %190 : vector<1x128xf32>
      %192 = arith.subf %165, %159 : vector<1x128xf32>
      %193 = arith.subf %168, %162 : vector<1x128xf32>
      %194 = arith.mulf %192, %193 : vector<1x128xf32>
      %195 = arith.subf %177, %171 : vector<1x128xf32>
      %196 = arith.subf %180, %174 : vector<1x128xf32>
      %197 = arith.mulf %195, %196 : vector<1x128xf32>
      %198 = arith.addf %194, %197 : vector<1x128xf32>
      %199 = arith.subf %198, %191 : vector<1x128xf32>
      %cst_66 = arith.constant 1.000000e-07 : f32
      %200 = vector.broadcast %cst_66 : f32 to vector<1x128xf32>
      %201 = arith.addf %199, %200 : vector<1x128xf32>
      %202 = tpu.reciprocal %201 {approx = true} : vector<1x128xf32> -> vector<1x128xf32>
      %203 = arith.mulf %191, %202 : vector<1x128xf32>
      %204 = arith.maximumf %165, %177 : vector<1x128xf32>
      %205 = arith.minimumf %159, %171 : vector<1x128xf32>
      %206 = arith.subf %204, %205 : vector<1x128xf32>
      %207 = arith.maximumf %168, %180 : vector<1x128xf32>
      %208 = arith.minimumf %162, %174 : vector<1x128xf32>
      %209 = arith.subf %207, %208 : vector<1x128xf32>
      %210 = arith.mulf %206, %209 : vector<1x128xf32>
      %cst_67 = arith.constant 1.000000e-07 : f32
      %211 = vector.broadcast %cst_67 : f32 to vector<1x128xf32>
      %212 = arith.addf %210, %211 : vector<1x128xf32>
      %213 = arith.subf %212, %201 : vector<1x128xf32>
      %214 = tpu.reciprocal %212 {approx = true} : vector<1x128xf32> -> vector<1x128xf32>
      %215 = arith.mulf %213, %214 : vector<1x128xf32>
      %216 = arith.subf %203, %215 : vector<1x128xf32>
      %cst_68 = arith.constant 1.000000e+00 : f32
      %217 = vector.broadcast %cst_68 : f32 to vector<1x128xf32>
      %218 = arith.subf %217, %216 : vector<1x128xf32>
      %219 = arith.mulf %218, %139 : vector<1x128xf32>
      %220 = vector.shape_cast %219 : vector<1x128xf32> to vector<1x1x128xf32>
      %cst_69 = arith.constant dense<0.000000e+00> : vector<1xf32>
      %221 = vector.multi_reduction <add>, %220, %cst_69 [1, 2] : vector<1x1x128xf32> to vector<1xf32>
      %222 = vector.shape_cast %221 : vector<1xf32> to vector<1x1x1xf32>
      %223 = vector.extract %222[0, 0, 0] : f32 from vector<1x1x1xf32>
      %c6_70 = arith.constant 6 : index
      %224 = memref.load %arg11[%c6_70] : memref<8xf32, #tpu.memory_space<smem>>
      memref.store %223, %arg11[%c6_70] : memref<8xf32, #tpu.memory_space<smem>>
    } else {
    }
    %c0 = arith.constant 0 : index
    %c0_1 = arith.constant 0 : index
    %c0_2 = arith.constant 0 : index
    %c0_3 = arith.constant 0 : index
    %3 = vector.load %arg5[%c0, %c0_1, %c0_2, %c0_3] : memref<1x1x16x21xf32, #tpu.memory_space<vmem>>, vector<1x1x16x21xf32>
    %4 = vector.shape_cast %3 : vector<1x1x16x21xf32> to vector<16x21xf32>
    %5 = tpu.iota {dimensions = array<i32: 1>} : vector<16x21xi32>
    %6 = tpu.iota {dimensions = array<i32: 0>} : vector<16x1xi32>
    %c20_i32 = arith.constant 20 : i32
    %7 = vector.broadcast %c20_i32 : i32 to vector<16x1xi32>
    %c2_i32 = arith.constant 2 : i32
    %8 = arith.muli %arg0, %c2_i32 : i32
    %9 = arith.addi %8, %arg1 : i32
    %10 = arith.index_cast %9 : i32 to index
    %c0_4 = arith.constant 0 : index
    %11 = memref.load %arg3[%10, %c0_4] : memref<4x4xi32, #tpu.memory_space<smem>>
    %12 = vector.broadcast %11 : i32 to vector<16x1xi32>
    %13 = arith.cmpi eq, %6, %12 : vector<16x1xi32>
    %14 = arith.index_cast %arg1 : i32 to index
    %c0_5 = arith.constant 0 : index
    %15 = memref.load %arg4[%14, %c0_5] : memref<2x4xi32, #tpu.memory_space<smem>>
    %16 = vector.broadcast %15 : i32 to vector<16x1xi32>
    %17 = arith.select %13, %16, %7 : vector<16x1xi1>, vector<16x1xi32>
    %18 = arith.index_cast %9 : i32 to index
    %c1 = arith.constant 1 : index
    %19 = memref.load %arg3[%18, %c1] : memref<4x4xi32, #tpu.memory_space<smem>>
    %20 = vector.broadcast %19 : i32 to vector<16x1xi32>
    %21 = arith.cmpi eq, %6, %20 : vector<16x1xi32>
    %22 = arith.index_cast %arg1 : i32 to index
    %c1_6 = arith.constant 1 : index
    %23 = memref.load %arg4[%22, %c1_6] : memref<2x4xi32, #tpu.memory_space<smem>>
    %24 = vector.broadcast %23 : i32 to vector<16x1xi32>
    %25 = arith.select %21, %24, %17 : vector<16x1xi1>, vector<16x1xi32>
    %26 = arith.index_cast %9 : i32 to index
    %c2 = arith.constant 2 : index
    %27 = memref.load %arg3[%26, %c2] : memref<4x4xi32, #tpu.memory_space<smem>>
    %28 = vector.broadcast %27 : i32 to vector<16x1xi32>
    %29 = arith.cmpi eq, %6, %28 : vector<16x1xi32>
    %30 = arith.index_cast %arg1 : i32 to index
    %c2_7 = arith.constant 2 : index
    %31 = memref.load %arg4[%30, %c2_7] : memref<2x4xi32, #tpu.memory_space<smem>>
    %32 = vector.broadcast %31 : i32 to vector<16x1xi32>
    %33 = arith.select %29, %32, %25 : vector<16x1xi1>, vector<16x1xi32>
    %34 = arith.index_cast %9 : i32 to index
    %c3 = arith.constant 3 : index
    %35 = memref.load %arg3[%34, %c3] : memref<4x4xi32, #tpu.memory_space<smem>>
    %36 = vector.broadcast %35 : i32 to vector<16x1xi32>
    %37 = arith.cmpi eq, %6, %36 : vector<16x1xi32>
    %38 = arith.index_cast %arg1 : i32 to index
    %c3_8 = arith.constant 3 : index
    %39 = memref.load %arg4[%38, %c3_8] : memref<2x4xi32, #tpu.memory_space<smem>>
    %40 = vector.broadcast %39 : i32 to vector<16x1xi32>
    %41 = arith.select %37, %40, %33 : vector<16x1xi1>, vector<16x1xi32>
    %42 = vector.broadcast %41 : vector<16x1xi32> to vector<16x21xi32>
    %43 = arith.cmpi eq, %5, %42 : vector<16x21xi32>
    %cst = arith.constant dense<0xFF800000> : vector<16xf32>
    %44 = vector.multi_reduction <maximumf>, %4, %cst [1] : vector<16x21xf32> to vector<16xf32>
    %45 = vector.shape_cast %44 : vector<16xf32> to vector<16x1xf32>
    %46 = vector.broadcast %45 : vector<16x1xf32> to vector<16x21xf32>
    %47 = arith.subf %4, %46 : vector<16x21xf32>
    %48 = math.exp %47 : vector<16x21xf32>
    %cst_9 = arith.constant dense<0.000000e+00> : vector<16xf32>
    %49 = vector.multi_reduction <add>, %48, %cst_9 [1] : vector<16x21xf32> to vector<16xf32>
    %50 = vector.shape_cast %49 : vector<16xf32> to vector<16x1xf32>
    %51 = math.log %50 : vector<16x1xf32>
    %52 = arith.addf %51, %45 : vector<16x1xf32>
    %53 = vector.broadcast %52 : vector<16x1xf32> to vector<16x21xf32>
    %54 = arith.subf %53, %4 : vector<16x21xf32>
    %cst_10 = arith.constant 0.000000e+00 : f32
    %55 = vector.broadcast %cst_10 : f32 to vector<16x21xf32>
    %56 = arith.select %43, %54, %55 : vector<16x21xi1>, vector<16x21xf32>
    %cst_11 = arith.constant dense<0.000000e+00> : vector<16xf32>
    %57 = vector.multi_reduction <add>, %56, %cst_11 [1] : vector<16x21xf32> to vector<16xf32>
    %58 = vector.shape_cast %57 : vector<16xf32> to vector<16x1xf32>
    %c0_12 = arith.constant 0 : index
    %c0_13 = arith.constant 0 : index
    %59 = vector.load %arg6[%c0_12, %c0_13] : memref<1x21xf32, #tpu.memory_space<vmem>>, vector<1x21xf32>
    %cst_14 = arith.constant 0.000000e+00 : f32
    %60 = vector.shape_cast %59 : vector<1x21xf32> to vector<1x21xf32>
    %61 = vector.broadcast %60 : vector<1x21xf32> to vector<16x21xf32>
    %62 = vector.broadcast %cst_14 : f32 to vector<16x21xf32>
    %63 = arith.select %43, %61, %62 : vector<16x21xi1>, vector<16x21xf32>
    %cst_15 = arith.constant dense<0.000000e+00> : vector<16xf32>
    %64 = vector.multi_reduction <add>, %63, %cst_15 [1] : vector<16x21xf32> to vector<16xf32>
    %65 = vector.shape_cast %64 : vector<16xf32> to vector<16x1xf32>
    %66 = vector.broadcast %45 : vector<16x1xf32> to vector<16x21xf32>
    %67 = arith.cmpf oge, %4, %66 : vector<16x21xf32>
    %c21_i32 = arith.constant 21 : i32
    %68 = vector.broadcast %c21_i32 : i32 to vector<16x21xi32>
    %69 = arith.select %67, %5, %68 : vector<16x21xi1>, vector<16x21xi32>
    %cst_16 = arith.constant dense<2147483647> : vector<16xi32>
    %70 = vector.multi_reduction <minsi>, %69, %cst_16 [1] : vector<16x21xi32> to vector<16xi32>
    %71 = vector.shape_cast %70 : vector<16xi32> to vector<16x1xi32>
    %c20_i32_17 = arith.constant 20 : i32
    %72 = vector.broadcast %c20_i32_17 : i32 to vector<16x1xi32>
    %73 = arith.cmpi ne, %71, %72 : vector<16x1xi32>
    %74 = arith.extui %73 : vector<16x1xi1> to vector<16x1xi32>
    %75 = arith.sitofp %74 : vector<16x1xi32> to vector<16x1xf32>
    %c20_i32_18 = arith.constant 20 : i32
    %76 = vector.broadcast %c20_i32_18 : i32 to vector<16x1xi32>
    %77 = arith.cmpi ne, %41, %76 : vector<16x1xi32>
    %78 = arith.extui %77 : vector<16x1xi1> to vector<16x1xi32>
    %79 = arith.sitofp %78 : vector<16x1xi32> to vector<16x1xf32>
    %80 = arith.cmpi eq, %71, %41 : vector<16x1xi32>
    %81 = arith.extui %80 : vector<16x1xi1> to vector<16x1xi32>
    %82 = arith.sitofp %81 : vector<16x1xi32> to vector<16x1xf32>
    %83 = arith.mulf %79, %82 : vector<16x1xf32>
    %c0_19 = arith.constant 0 : index
    %84 = memref.load %arg11[%c0_19] : memref<8xf32, #tpu.memory_space<smem>>
    %85 = arith.mulf %65, %58 : vector<16x1xf32>
    %86 = vector.shape_cast %85 : vector<16x1xf32> to vector<1x16x1xf32>
    %cst_20 = arith.constant dense<0.000000e+00> : vector<1xf32>
    %87 = vector.multi_reduction <add>, %86, %cst_20 [1, 2] : vector<1x16x1xf32> to vector<1xf32>
    %88 = vector.shape_cast %87 : vector<1xf32> to vector<1x1x1xf32>
    %89 = vector.extract %88[0, 0, 0] : f32 from vector<1x1x1xf32>
    %90 = arith.addf %84, %89 : f32
    %c0_21 = arith.constant 0 : index
    %91 = memref.load %arg11[%c0_21] : memref<8xf32, #tpu.memory_space<smem>>
    memref.store %90, %arg11[%c0_21] : memref<8xf32, #tpu.memory_space<smem>>
    %c1_22 = arith.constant 1 : index
    %92 = memref.load %arg11[%c1_22] : memref<8xf32, #tpu.memory_space<smem>>
    %93 = vector.shape_cast %65 : vector<16x1xf32> to vector<1x16x1xf32>
    %cst_23 = arith.constant dense<0.000000e+00> : vector<1xf32>
    %94 = vector.multi_reduction <add>, %93, %cst_23 [1, 2] : vector<1x16x1xf32> to vector<1xf32>
    %95 = vector.shape_cast %94 : vector<1xf32> to vector<1x1x1xf32>
    %96 = vector.extract %95[0, 0, 0] : f32 from vector<1x1x1xf32>
    %97 = arith.addf %92, %96 : f32
    %c1_24 = arith.constant 1 : index
    %98 = memref.load %arg11[%c1_24] : memref<8xf32, #tpu.memory_space<smem>>
    memref.store %97, %arg11[%c1_24] : memref<8xf32, #tpu.memory_space<smem>>
    %c2_25 = arith.constant 2 : index
    %99 = memref.load %arg11[%c2_25] : memref<8xf32, #tpu.memory_space<smem>>
    %100 = vector.shape_cast %75 : vector<16x1xf32> to vector<1x16x1xf32>
    %cst_26 = arith.constant dense<0.000000e+00> : vector<1xf32>
    %101 = vector.multi_reduction <add>, %100, %cst_26 [1, 2] : vector<1x16x1xf32> to vector<1xf32>
    %102 = vector.shape_cast %101 : vector<1xf32> to vector<1x1x1xf32>
    %103 = vector.extract %102[0, 0, 0] : f32 from vector<1x1x1xf32>
    %104 = arith.index_cast %arg1 : i32 to index
    %105 = memref.load %arg2[%104] : memref<2xi32, #tpu.memory_space<smem>>
    %106 = arith.sitofp %105 : i32 to f32
    %107 = arith.subf %103, %106 : f32
    %108 = math.absf %107 : f32
    %109 = arith.addf %99, %108 : f32
    %c2_27 = arith.constant 2 : index
    %110 = memref.load %arg11[%c2_27] : memref<8xf32, #tpu.memory_space<smem>>
    memref.store %109, %arg11[%c2_27] : memref<8xf32, #tpu.memory_space<smem>>
    %c3_28 = arith.constant 3 : index
    %111 = memref.load %arg11[%c3_28] : memref<8xf32, #tpu.memory_space<smem>>
    %112 = vector.shape_cast %83 : vector<16x1xf32> to vector<1x16x1xf32>
    %cst_29 = arith.constant dense<0.000000e+00> : vector<1xf32>
    %113 = vector.multi_reduction <add>, %112, %cst_29 [1, 2] : vector<1x16x1xf32> to vector<1xf32>
    %114 = vector.shape_cast %113 : vector<1xf32> to vector<1x1x1xf32>
    %115 = vector.extract %114[0, 0, 0] : f32 from vector<1x1x1xf32>
    %116 = arith.addf %111, %115 : f32
    %c3_30 = arith.constant 3 : index
    %117 = memref.load %arg11[%c3_30] : memref<8xf32, #tpu.memory_space<smem>>
    memref.store %116, %arg11[%c3_30] : memref<8xf32, #tpu.memory_space<smem>>
    %c4 = arith.constant 4 : index
    %118 = memref.load %arg11[%c4] : memref<8xf32, #tpu.memory_space<smem>>
    %119 = vector.shape_cast %79 : vector<16x1xf32> to vector<1x16x1xf32>
    %cst_31 = arith.constant dense<0.000000e+00> : vector<1xf32>
    %120 = vector.multi_reduction <add>, %119, %cst_31 [1, 2] : vector<1x16x1xf32> to vector<1xf32>
    %121 = vector.shape_cast %120 : vector<1xf32> to vector<1x1x1xf32>
    %122 = vector.extract %121[0, 0, 0] : f32 from vector<1x1x1xf32>
    %123 = arith.addf %118, %122 : f32
    %c4_32 = arith.constant 4 : index
    %124 = memref.load %arg11[%c4_32] : memref<8xf32, #tpu.memory_space<smem>>
    memref.store %123, %arg11[%c4_32] : memref<8xf32, #tpu.memory_space<smem>>
    %c1_i32 = arith.constant 1 : i32
    %125 = arith.cmpi eq, %arg1, %c1_i32 : i32
    %126 = arith.extui %125 : i1 to i32
    %c0_i32_33 = arith.constant 0 : i32
    %127 = arith.cmpi ne, %126, %c0_i32_33 : i32
    scf.if %127 {
      %c0_34 = arith.constant 0 : index
      %128 = memref.load %arg11[%c0_34] : memref<8xf32, #tpu.memory_space<smem>>
      %c1_35 = arith.constant 1 : index
      %129 = memref.load %arg11[%c1_35] : memref<8xf32, #tpu.memory_space<smem>>
      %130 = arith.divf %128, %129 : f32
      %c2_36 = arith.constant 2 : index
      %131 = memref.load %arg11[%c2_36] : memref<8xf32, #tpu.memory_space<smem>>
      %cst_37 = arith.constant 5.000000e-01 : f32
      %132 = arith.mulf %131, %cst_37 : f32
      %c3_38 = arith.constant 3 : index
      %133 = memref.load %arg11[%c3_38] : memref<8xf32, #tpu.memory_space<smem>>
      %cst_39 = arith.constant 1.000000e+02 : f32
      %134 = arith.mulf %cst_39, %133 : f32
      %c4_40 = arith.constant 4 : index
      %135 = memref.load %arg11[%c4_40] : memref<8xf32, #tpu.memory_space<smem>>
      %cst_41 = arith.constant 1.000000e+00 : f32
      %136 = arith.maximumf %135, %cst_41 : f32
      %137 = arith.divf %134, %136 : f32
      %cst_42 = arith.constant 1.000000e+02 : f32
      %138 = arith.subf %cst_42, %137 : f32
      %139 = tpu.iota {dimensions = array<i32: 2>} : vector<1x1x8xi32>
      %c0_i32_43 = arith.constant 0 : i32
      %140 = vector.broadcast %c0_i32_43 : i32 to vector<1x1x8xi32>
      %141 = arith.cmpi eq, %139, %140 : vector<1x1x8xi32>
      %cst_44 = arith.constant 0.000000e+00 : f32
      %142 = vector.broadcast %130 : f32 to vector<1x1x8xf32>
      %143 = vector.broadcast %cst_44 : f32 to vector<1x1x8xf32>
      %144 = arith.select %141, %142, %143 : vector<1x1x8xi1>, vector<1x1x8xf32>
      %c1_i32_45 = arith.constant 1 : i32
      %145 = vector.broadcast %c1_i32_45 : i32 to vector<1x1x8xi32>
      %146 = arith.cmpi eq, %139, %145 : vector<1x1x8xi32>
      %cst_46 = arith.constant 0.000000e+00 : f32
      %147 = vector.broadcast %132 : f32 to vector<1x1x8xf32>
      %148 = vector.broadcast %cst_46 : f32 to vector<1x1x8xf32>
      %149 = arith.select %146, %147, %148 : vector<1x1x8xi1>, vector<1x1x8xf32>
      %150 = arith.addf %144, %149 : vector<1x1x8xf32>
      %c2_i32_47 = arith.constant 2 : i32
      %151 = vector.broadcast %c2_i32_47 : i32 to vector<1x1x8xi32>
      %152 = arith.cmpi eq, %139, %151 : vector<1x1x8xi32>
      %cst_48 = arith.constant 0.000000e+00 : f32
      %153 = vector.broadcast %138 : f32 to vector<1x1x8xf32>
      %154 = vector.broadcast %cst_48 : f32 to vector<1x1x8xf32>
      %155 = arith.select %152, %153, %154 : vector<1x1x8xi1>, vector<1x1x8xf32>
      %156 = arith.addf %150, %155 : vector<1x1x8xf32>
      %c3_i32 = arith.constant 3 : i32
      %157 = vector.broadcast %c3_i32 : i32 to vector<1x1x8xi32>
      %158 = arith.cmpi eq, %139, %157 : vector<1x1x8xi32>
      %c5 = arith.constant 5 : index
      %159 = memref.load %arg11[%c5] : memref<8xf32, #tpu.memory_space<smem>>
      %cst_49 = arith.constant 0.000000e+00 : f32
      %160 = vector.broadcast %159 : f32 to vector<1x1x8xf32>
      %161 = vector.broadcast %cst_49 : f32 to vector<1x1x8xf32>
      %162 = arith.select %158, %160, %161 : vector<1x1x8xi1>, vector<1x1x8xf32>
      %163 = arith.addf %156, %162 : vector<1x1x8xf32>
      %c4_i32 = arith.constant 4 : i32
      %164 = vector.broadcast %c4_i32 : i32 to vector<1x1x8xi32>
      %165 = arith.cmpi eq, %139, %164 : vector<1x1x8xi32>
      %c6 = arith.constant 6 : index
      %166 = memref.load %arg11[%c6] : memref<8xf32, #tpu.memory_space<smem>>
      %cst_50 = arith.constant 0.000000e+00 : f32
      %167 = vector.broadcast %166 : f32 to vector<1x1x8xf32>
      %168 = vector.broadcast %cst_50 : f32 to vector<1x1x8xf32>
      %169 = arith.select %165, %167, %168 : vector<1x1x8xi1>, vector<1x1x8xf32>
      %170 = arith.addf %163, %169 : vector<1x1x8xf32>
      %c0_51 = arith.constant 0 : index
      %c0_52 = arith.constant 0 : index
      %c0_53 = arith.constant 0 : index
      %171 = vector.load %arg10[%c0_51, %c0_52, %c0_53] : memref<1x1x8xf32, #tpu.memory_space<vmem>>, vector<1x1x8xf32>
      tpu.vector_store %arg10[%c0_51, %c0_52, %c0_53], %170 {strides = array<i32>} : memref<1x1x8xf32, #tpu.memory_space<vmem>>, vector<1x1x8xf32>,
    } else {
    }
    return
  }
  func.func @transform_0(%arg0: i32, %arg1: i32, %arg2: memref<2xi32, #tpu.memory_space<smem>>, %arg3: memref<4x4xi32, #tpu.memory_space<smem>>, %arg4: memref<2x4xi32, #tpu.memory_space<smem>>) -> (i32, i32, i32, i32) {
    %c0_i32 = arith.constant 0 : i32
    %c0_i32_0 = arith.constant 0 : i32
    %c0_i32_1 = arith.constant 0 : i32
    return %arg0, %arg1, %c0_i32, %c0_i32_0 : i32, i32, i32, i32
  }
  func.func @transform_1(%arg0: i32, %arg1: i32, %arg2: memref<2xi32, #tpu.memory_space<smem>>, %arg3: memref<4x4xi32, #tpu.memory_space<smem>>, %arg4: memref<2x4xi32, #tpu.memory_space<smem>>) -> (i32, i32) {
    %c0_i32 = arith.constant 0 : i32
    %c0_i32_0 = arith.constant 0 : i32
    %c0_i32_1 = arith.constant 0 : i32
    return %c0_i32, %c0_i32_0 : i32, i32
  }
  func.func @transform_2(%arg0: i32, %arg1: i32, %arg2: memref<2xi32, #tpu.memory_space<smem>>, %arg3: memref<4x4xi32, #tpu.memory_space<smem>>, %arg4: memref<2x4xi32, #tpu.memory_space<smem>>) -> (i32, i32, i32) {
    %c0_i32 = arith.constant 0 : i32
    %c0_i32_0 = arith.constant 0 : i32
    %c0_i32_1 = arith.constant 0 : i32
    return %arg0, %c0_i32, %c0_i32_0 : i32, i32, i32
  }
  func.func @transform_3(%arg0: i32, %arg1: i32, %arg2: memref<2xi32, #tpu.memory_space<smem>>, %arg3: memref<4x4xi32, #tpu.memory_space<smem>>, %arg4: memref<2x4xi32, #tpu.memory_space<smem>>) -> (i32, i32) {
    %c0_i32 = arith.constant 0 : i32
    %c0_i32_0 = arith.constant 0 : i32
    %c0_i32_1 = arith.constant 0 : i32
    return %c0_i32, %c0_i32_0 : i32, i32
  }
  func.func @transform_4(%arg0: i32, %arg1: i32, %arg2: memref<2xi32, #tpu.memory_space<smem>>, %arg3: memref<4x4xi32, #tpu.memory_space<smem>>, %arg4: memref<2x4xi32, #tpu.memory_space<smem>>) -> (i32, i32) {
    %c0_i32 = arith.constant 0 : i32
    %c0_i32_0 = arith.constant 0 : i32
    %c0_i32_1 = arith.constant 0 : i32
    return %c0_i32, %c0_i32_0 : i32, i32
  }
  func.func @transform_5(%arg0: i32, %arg1: i32, %arg2: memref<2xi32, #tpu.memory_space<smem>>, %arg3: memref<4x4xi32, #tpu.memory_space<smem>>, %arg4: memref<2x4xi32, #tpu.memory_space<smem>>) -> (i32, i32, i32) {
    %c0_i32 = arith.constant 0 : i32
    %c0_i32_0 = arith.constant 0 : i32
    %c0_i32_1 = arith.constant 0 : i32
    return %arg0, %c0_i32, %c0_i32_0 : i32, i32, i32
  }
}

</mosaic_0001>

<llo_original>
// kernel: _detr_losses_all_layers.1
$region0: #{_detr_losses_all_layers.1}
  #allocation0 [shape = 'u32[]', space=smem, size = 0x4, offset = 0x4, fixed_abs, tag = 'smem constant byte address 0x4 - core index']
  #allocation1 [shape = 'u32[144,128]{1,0:T(1,128)}', space=vmem, size = 0x12000, scoped, tag = 'internal scratch']
  #allocation2 [shape = 'f32[8]{0:T(128)}', space=smem, size = 0x200, scoped, tag = 'scratch operand']
  #allocation3 [shape = 's32[1]{0}', space=sflag, size = 0x4, scoped, tag = 'scoped memory for _detr_losses_all_layers.1']
  #allocation4 [shape = 'u8[512]{0}', space=smem, size = 0x200, scoped, tag = 'prefetched SMEM operand 0']
  #allocation5 [shape = 'u8[2048]{0}', space=smem, size = 0x800, scoped, tag = 'prefetched SMEM operand 1']
  #allocation6 [shape = 'u8[1024]{0}', space=smem, size = 0x400, scoped, tag = 'prefetched SMEM operand 2']
  %s0 = inlined_call_operand.vmem [shape: s32[2], index: 0, kind: input, shape index: {}]
  %s1 = inlined_call_operand.vmem [shape: s32[4,4], index: 1, kind: input, shape index: {}]
  %s2 = inlined_call_operand.vmem [shape: s32[2,4], index: 2, kind: input, shape index: {}]
  %s3 = inlined_call_operand.vmem [shape: f32[2,2,16,21], index: 3, kind: input, shape index: {}]
  %s4 = inlined_call_operand.vmem [shape: f32[1,21], index: 4, kind: input, shape index: {}]
  %s5 = inlined_call_operand.vmem [shape: f32[2,4,128], index: 5, kind: input, shape index: {}]
  %s6 = inlined_call_operand.vmem [shape: f32[4,128], index: 6, kind: input, shape index: {}]
  %s7 = inlined_call_operand.vmem [shape: f32[1,128], index: 7, kind: input, shape index: {}]
  %s8 = inlined_call_operand.vmem [shape: f32[2,1,8], index: 8, kind: output, shape index: {}]
  %s9 = sld [smem:[#allocation0]]
  $region61: #{_detr_losses_all_layers.1} parent=0
    _
  %s11 = ssub.s32 1, %s9
  %s12 = scalar_select 0, %s11, %s9
  %s13 = sshll.u32 %s0, 4
  %s14 = int_to_ptr.vmem [resolvable:$true] %s13
  %16 = dma.vmem_to_smem %s14, 16, [#allocation4], [#allocation3]
  %s17 = sshll.u32 %s1, 4
  %s18 = int_to_ptr.vmem [resolvable:$true] %s17
  %20 = dma.vmem_to_smem %s18, 64, [#allocation5], [#allocation3]
  %s21 = sshll.u32 %s2, 4
  %s22 = int_to_ptr.vmem [resolvable:$true] %s21
  %24 = dma.vmem_to_smem %s22, 32, [#allocation6], [#allocation3]
  %25 = dma.done [#allocation3], 112
  %26 = sfence
  loop: start=0, step=1, limit=6
  $region2: #{_detr_losses_all_layers.1} parent=0 // loop_pre_header
    _
  $region3: #{_detr_losses_all_layers.1} parent=0 // loop_header
    %s28 = sphi 0, %s32
    %p29 = scmp.ge.s32.totalorder %s28, 6
    %s35 = sphi 0, %s47
    %s36 = sphi 0, %s43
    %s37 = sphi 0, %s35
    %s38 = sphi 0, %s36
    %s39 = sphi 0, %s37
    %s40 = sphi 0, %s38
    %s52 = sphi 0, %s54
    %s55 = sphi 0, %s52
    %s56 = sphi 0, %s55
    %s72 = sphi 0, %s56
    %s76 = sphi 0, %s76
    %s78 = sphi 0, %s76
    %s79 = sphi 0, %s78
    %s93 = sphi 0, %s79
    %s99 = sphi 0, %s101
    %s102 = sphi 0, %s99
    %s103 = sphi 0, %s102
    %s119 = sphi 0, %s103
    %s123 = sphi 0, %s123
    %s125 = sphi 0, %s123
    %s126 = sphi 0, %s125
    %s140 = sphi 0, %s126
    %s144 = sphi 0, %s144
    %s146 = sphi 0, %s144
    %s147 = sphi 0, %s146
    %s161 = sphi 0, %s147
    %s167 = sphi 0, %s169
    %s170 = sphi 0, %s167
    %s171 = sphi 0, %s170
    %s187 = sphi 0, %s171
  $region4: #{_detr_losses_all_layers.1} parent=0 // loop_header_branch
    %31 = sbr.rel (%p29) target = $region8
  $region5: #{_detr_losses_all_layers.1} parent=0 // loop_body
    %s33 = ssub.s32 %s28, 1
    %s34 = ssub.s32 %s28, 2
    %s41 = sadd.s32 1, %s36
    %p42 = scmp.ge.s32.totalorder %s41, 2
    %s43 = scalar_select %p42, 0, %s41
    %s44 = sadd.s32 1, %s35
    %s45 = scalar_select %p42, %s44, %s35
    %p46 = scmp.ge.s32.totalorder %s45, 2
    %s47 = scalar_select %p46, 0, %s45
    %s48 = ssub.s32 %s35, %s47
    %s49 = ssub.s32 %s36, %s43
    %s50 = sor.u32 %s48, %s49
    %p51 = scmp.eq.s32.totalorder %s50, 0
    %s53 = sadd.s32 %s52, 1
    %s54 = scalar_select %p51, %s52, %s53
    %p57 = pneg %p51
    %p58 = scmp.eq.s32.totalorder %s28, 3
    %p59 = por %p57, %p58
    %p60 = scmp.ne.s32.totalorder %s52, %s55
    %p61 = scmp.eq.s32.totalorder %s28, 0
    %p62 = por %p60, %p61
    %p63 = scmp.ne.s32.totalorder %s52, %s55
    %p64 = scmp.eq.s32.totalorder %s33, 3
    %p65 = por %p63, %p64
    %p66 = scmp.ne.s32.totalorder %s55, %s56
    %p67 = scmp.eq.s32.totalorder %s33, 0
    %p68 = por %p66, %p67
    %p69 = scmp.ne.s32.totalorder %s55, %s56
    %p70 = scmp.eq.s32.totalorder %s34, 3
    %p71 = por %p69, %p70
    %p73 = scmp.ne.s32.totalorder %s56, %s72
    %p74 = scmp.eq.s32.totalorder %s34, 0
    %p75 = por %p73, %p74
    %s77 = sadd.s32 %s76, 1
    %p80 = scmp.eq.s32.totalorder %s28, 3
    %p81 = scmp.ne.s32.totalorder %s76, %s78
    %p82 = scmp.eq.s32.totalorder %s28, 0
    %p83 = por %p81, %p82
    %p84 = scmp.ne.s32.totalorder %s76, %s78
    %p85 = scmp.eq.s32.totalorder %s33, 3
    %p86 = por %p84, %p85
    %p87 = scmp.ne.s32.totalorder %s78, %s79
    %p88 = scmp.eq.s32.totalorder %s33, 0
    %p89 = por %p87, %p88
    %p90 = scmp.ne.s32.totalorder %s78, %s79
    %p91 = scmp.eq.s32.totalorder %s34, 3
    %p92 = por %p90, %p91
    %p94 = scmp.ne.s32.totalorder %s79, %s93
    %p95 = scmp.eq.s32.totalorder %s34, 0
    %p96 = por %p94, %p95
    %s97 = ssub.s32 %s35, %s47
    %p98 = scmp.eq.s32.totalorder %s97, 0
    %s100 = sadd.s32 %s99, 1
    %s101 = scalar_select %p98, %s99, %s100
    %p104 = pneg %p98
    %p105 = scmp.eq.s32.totalorder %s28, 3
    %p106 = por %p104, %p105
    %p107 = scmp.ne.s32.totalorder %s99, %s102
    %p108 = scmp.eq.s32.totalorder %s28, 0
    %p109 = por %p107, %p108
    %p110 = scmp.ne.s32.totalorder %s99, %s102
    %p111 = scmp.eq.s32.totalorder %s33, 3
    %p112 = por %p110, %p111
    %p113 = scmp.ne.s32.totalorder %s102, %s103
    %p114 = scmp.eq.s32.totalorder %s33, 0
    %p115 = por %p113, %p114
    %p116 = scmp.ne.s32.totalorder %s102, %s103
    %p117 = scmp.eq.s32.totalorder %s34, 3
    %p118 = por %p116, %p117
    %p120 = scmp.ne.s32.totalorder %s103, %s119
    %p121 = scmp.eq.s32.totalorder %s34, 0
    %p122 = por %p120, %p121
    %s124 = sadd.s32 %s123, 1
    %p127 = scmp.eq.s32.totalorder %s28, 3
    %p128 = scmp.ne.s32.totalorder %s123, %s125
    %p129 = scmp.eq.s32.totalorder %s28, 0
    %p130 = por %p128, %p129
    %p131 = scmp.ne.s32.totalorder %s123, %s125
    %p132 = scmp.eq.s32.totalorder %s33, 3
    %p133 = por %p131, %p132
    %p134 = scmp.ne.s32.totalorder %s125, %s126
    %p135 = scmp.eq.s32.totalorder %s33, 0
    %p136 = por %p134, %p135
    %p137 = scmp.ne.s32.totalorder %s125, %s126
    %p138 = scmp.eq.s32.totalorder %s34, 3
    %p139 = por %p137, %p138
    %p141 = scmp.ne.s32.totalorder %s126, %s140
    %p142 = scmp.eq.s32.totalorder %s34, 0
    %p143 = por %p141, %p142
    %s145 = sadd.s32 %s144, 1
    %p148 = scmp.eq.s32.totalorder %s28, 3
    %p149 = scmp.ne.s32.totalorder %s144, %s146
    %p150 = scmp.eq.s32.totalorder %s28, 0
    %p151 = por %p149, %p150
    %p152 = scmp.ne.s32.totalorder %s144, %s146
    %p153 = scmp.eq.s32.totalorder %s33, 3
    %p154 = por %p152, %p153
    %p155 = scmp.ne.s32.totalorder %s146, %s147
    %p156 = scmp.eq.s32.totalorder %s33, 0
    %p157 = por %p155, %p156
    %p158 = scmp.ne.s32.totalorder %s146, %s147
    %p159 = scmp.eq.s32.totalorder %s34, 3
    %p160 = por %p158, %p159
    %p162 = scmp.ne.s32.totalorder %s147, %s161
    %p163 = scmp.eq.s32.totalorder %s34, 0
    %p164 = por %p162, %p163
    %s165 = ssub.s32 %s35, %s47
    %p166 = scmp.eq.s32.totalorder %s165, 0
    %s168 = sadd.s32 %s167, 1
    %s169 = scalar_select %p166, %s167, %s168
    %p172 = pneg %p166
    %p173 = scmp.eq.s32.totalorder %s28, 3
    %p174 = por %p172, %p173
    %p175 = scmp.ne.s32.totalorder %s167, %s170
    %p176 = scmp.eq.s32.totalorder %s28, 0
    %p177 = por %p175, %p176
    %p178 = scmp.ne.s32.totalorder %s167, %s170
    %p179 = scmp.eq.s32.totalorder %s33, 3
    %p180 = por %p178, %p179
    %p181 = scmp.ne.s32.totalorder %s170, %s171
    %p182 = scmp.eq.s32.totalorder %s33, 0
    %p183 = por %p181, %p182
    %p184 = scmp.ne.s32.totalorder %s170, %s171
    %p185 = scmp.eq.s32.totalorder %s34, 3
    %p186 = por %p184, %p185
    %p188 = scmp.ne.s32.totalorder %s171, %s187
    %p189 = scmp.eq.s32.totalorder %s34, 0
    %p190 = por %p188, %p189
    %p191 = scmp.le.s32.totalorder 1, %s28
    %p192 = scmp.lt.s32.totalorder %s28, 5
    %p193 = pnand %p191, %p192
    %p194 = pneg %p193
    // Predicated region
    $region9: #{_detr_losses_all_layers.1} parent=5 // pred_check
      _
    $region10: #{_detr_losses_all_layers.1} parent=5 // pred_check_branch
      %196 = sbr.rel (%p193) target = $region12
    $region11: #{_detr_losses_all_layers.1} parent=5 // pred_region
      %s197 = ssub.s32 %s28, 1
      // Predicated region
      $region13: #{_detr_losses_all_layers.1} parent=11 // pred_check
        %p198 = pneg %p89
      $region14: #{_detr_losses_all_layers.1} parent=11 // pred_check_branch
        %200 = sbr.rel (%p198) target = $region16
      $region15: #{_detr_losses_all_layers.1} parent=11 // pred_region
        _
      $region16: #{_detr_losses_all_layers.1} parent=11 // pred_fallthru
        _
      // Predicated region
      $region17: #{_detr_losses_all_layers.1} parent=11 // pred_check
        %p201 = pneg %p136
      $region18: #{_detr_losses_all_layers.1} parent=11 // pred_check_branch
        %203 = sbr.rel (%p201) target = $region20
      $region19: #{_detr_losses_all_layers.1} parent=11 // pred_region
        _
      $region20: #{_detr_losses_all_layers.1} parent=11 // pred_fallthru
        _
      // Predicated region
      $region21: #{_detr_losses_all_layers.1} parent=11 // pred_check
        %p204 = pneg %p157
      $region22: #{_detr_losses_all_layers.1} parent=11 // pred_check_branch
        %206 = sbr.rel (%p204) target = $region24
      $region23: #{_detr_losses_all_layers.1} parent=11 // pred_region
        _
      $region24: #{_detr_losses_all_layers.1} parent=11 // pred_fallthru
        _
    $region12: #{_detr_losses_all_layers.1} parent=5 // pred_fallthru
      _
    %p207 = scmp.lt.s32.totalorder %s28, 4
    // Predicated region
    $region25: #{_detr_losses_all_layers.1} parent=5 // pred_check
      %p208 = pneg %p207
    $region26: #{_detr_losses_all_layers.1} parent=5 // pred_check_branch
      %210 = sbr.rel (%p208) target = $region28
    $region27: #{_detr_losses_all_layers.1} parent=5 // pred_region
      // Predicated region
      $region29: #{_detr_losses_all_layers.1} parent=27 // pred_check
        %p211 = pneg %p62
      $region30: #{_detr_losses_all_layers.1} parent=27 // pred_check_branch
        %213 = sbr.rel (%p211) target = $region32
      $region31: #{_detr_losses_all_layers.1} parent=27 // pred_region
        %p214 = scmp.lt.s32.totalorder %s35, 1
        %s215 = scalar_select %p214, %s35, 1
        %p216 = scmp.lt.s32.totalorder %s36, 1
        %s217 = scalar_select %p216, %s36, 1
        %s218 = smul.addr %s217, 2
        %s219 = smul.addr %s215, 4
        %s220 = sadd.s32 %s218, %s219
        %s221 = smul.addr %s220, 8
        %s222 = scalar_lea.vmem %s3, %s221
      $region32: #{_detr_losses_all_layers.1} parent=27 // pred_fallthru
        _
      // Predicated region
      $region33: #{_detr_losses_all_layers.1} parent=27 // pred_check
        %p223 = pneg %p109
      $region34: #{_detr_losses_all_layers.1} parent=27 // pred_check_branch
        %225 = sbr.rel (%p223) target = $region36
      $region35: #{_detr_losses_all_layers.1} parent=27 // pred_region
        %p226 = scmp.lt.s32.totalorder %s35, 1
        %s227 = scalar_select %p226, %s35, 1
        %s228 = smul.addr %s227, 4
        %s229 = scalar_lea.vmem %s5, %s228
      $region36: #{_detr_losses_all_layers.1} parent=27 // pred_fallthru
        _
    $region28: #{_detr_losses_all_layers.1} parent=5 // pred_fallthru
      _
    %p230 = scmp.le.s32.totalorder 1, %s28
    %p231 = scmp.lt.s32.totalorder %s28, 5
    %p232 = pnand %p230, %p231
    %p233 = pneg %p232
    // Predicated region
    $region37: #{_detr_losses_all_layers.1} parent=5 // pred_check
      _
    $region38: #{_detr_losses_all_layers.1} parent=5 // pred_check_branch
      %235 = sbr.rel (%p232) target = $region40
    $region39: #{_detr_losses_all_layers.1} parent=5 // pred_region
      %s236 = ssub.s32 %s28, 1
      %p237 = scmp.lt.s32.totalorder %s37, 1
      %s238 = scalar_select %p237, %s37, 1
      %p239 = scmp.lt.s32.totalorder %s38, 1
      %s240 = scalar_select %p239, %s38, 1
      %s241 = smul.addr %s240, 2
      %s242 = smul.addr %s238, 4
      %s243 = sadd.s32 %s241, %s242
      %s244 = smul.addr %s243, 8
      %s245 = scalar_lea.vmem %s3, %s244
      %p246 = pneg %p68
      %p247 = pneg %p65
      %p248 = pneg %p89
      %p249 = pneg %p86
      %p250 = scmp.lt.s32.totalorder %s37, 1
      %s251 = scalar_select %p250, %s37, 1
      %s252 = smul.addr %s251, 4
      %s253 = scalar_lea.vmem %s5, %s252
      %p254 = pneg %p115
      %p255 = pneg %p112
      %p256 = pneg %p136
      %p257 = pneg %p133
      %p258 = pneg %p157
      %p259 = pneg %p154
      %p260 = pneg %p183
      %p261 = pneg %p180
      %p262 = scmp.lt.s32.totalorder %s37, 1
      %s263 = scalar_select %p262, %s37, 1
      %s264 = scalar_lea.vmem %s8, %s263
      %p265 = scmp.lt.s32.totalorder %s37, 1
      %s266 = scalar_select %p265, %s37, 1
      %p267 = scmp.lt.s32.totalorder %s38, 1
      %s268 = scalar_select %p267, %s38, 1
      %s269 = smul.addr %s268, 2
      %s270 = smul.addr %s266, 4
      %s271 = sadd.s32 %s269, %s270
      %s272 = smul.addr %s271, 8
      %s273 = scalar_lea.vmem %s3, %s272
      %p274 = scmp.lt.s32.totalorder %s37, 1
      %s275 = scalar_select %p274, %s37, 1
      %s276 = smul.addr %s275, 4
      %s277 = scalar_lea.vmem %s5, %s276
      %p278 = scmp.lt.s32.totalorder %s37, 1
      %s279 = scalar_select %p278, %s37, 1
      %s280 = scalar_lea.vmem %s8, %s279
      %p281 = scmp.eq.s32.totalorder %s38, 0
      // Predicated region
      $region41: #{_detr_losses_all_layers.1} parent=39 // pred_check
        %p282 = pneg %p281
      $region42: #{_detr_losses_all_layers.1} parent=39 // pred_check_branch
        %284 = sbr.rel (%p282) target = $region44
      $region43: #{_detr_losses_all_layers.1} parent=39 // pred_region
        %s285 = scalar_lea.smem [#allocation2], 0
        %286 = sst [smem:[%s285]] 0.0
        %s287 = scalar_lea.smem [#allocation2], 1
        %288 = sst [smem:[%s287]] 0.0
        %s289 = scalar_lea.smem [#allocation2], 2
        %290 = sst [smem:[%s289]] 0.0
        %s291 = scalar_lea.smem [#allocation2], 3
        %292 = sst [smem:[%s291]] 0.0
        %s293 = scalar_lea.smem [#allocation2], 4
        %294 = sst [smem:[%s293]] 0.0
        %s295 = scalar_lea.smem [#allocation2], 5
        %296 = sst [smem:[%s295]] 0.0
        %s297 = scalar_lea.smem [#allocation2], 6
        %298 = sst [smem:[%s297]] 0.0
        %s299 = scalar_lea.smem [#allocation2], 7
        %300 = sst [smem:[%s299]] 0.0
        %v301 = vld [vmem:[%s277] sm:$0xf]
        %v302 = vld [vmem:[%s6] sm:$0xf]
        %v303 = vld [vmem:[%s7] sm:$0x1]
        %v304 = vsub.f32 %v301, %v302
        %v305 = vand.u32 2147483647, %v304
        %v307 = vlaneseq
        %v308 = vshrl.u32 %v307, 7
        %v309 = vsub.s32 0, %v308
        %v310 = vrot.slane %v303, %v309
        %v312 = vmul.f32 %v305, %v310
        %vm313 = vcmask 1043456
        %v314 = vsel %vm313, %v312, 0.0
        %315 = vadd.xlane.f32.xlu0 %v314
        %v316 = vpop.xlane.xlu0 %315
        %v317 = vrot.slane %v316, 4
        %v318 = vadd.f32 %v316, %v317
        %v319 = vrot.slane %v318, 2
        %v320 = vadd.f32 %v318, %v319
        %v321 = vrot.slane %v320, 1
        %v322 = vadd.f32 %v320, %v321
        %s323 = vtos %v322
        %324 = sst [smem:[%s295]] %s323
        %v325 = vmul.f32 %v301, 0.5
        %v327 = vrot.slane %v325, 2
        %v329 = vsub.f32 %v301, %v327
        %v330 = vadd.f32 %v301, %v327
        %v331 = vmul.f32 %v302, 0.5
        %v333 = vrot.slane %v331, 2
        %v335 = vsub.f32 %v302, %v333
        %v336 = vadd.f32 %v302, %v333
        %v337 = vmin.f32 %v330, %v336
        %v338 = vmax.f32 %v329, %v335
        %v339 = vsub.f32 %v337, %v338
        %v340 = vmax.f32 %v339, 0.0
        %v342 = vrot.slane %v340, 1
        %v344 = vmul.f32 %v340, %v342
        %v345 = vsub.f32 %v330, %v329
        %v347 = vrot.slane %v345, 1
        %v349 = vmul.f32 %v345, %v347
        %v350 = vsub.f32 %v336, %v335
        %v352 = vrot.slane %v350, 1
        %v354 = vmul.f32 %v350, %v352
        %v355 = vadd.f32 %v349, %v354
        %v356 = vsub.f32 %v355, %v344
        %v357 = vadd.f32 %v356, 1e-07
        %v358 = vrcp.pop %v357
        %v359 = vmul.f32 %v344, %v358
        %v360 = vmax.f32 %v330, %v336
        %v361 = vmin.f32 %v329, %v335
        %v362 = vsub.f32 %v360, %v361
        %v364 = vrot.slane %v362, 1
        %v366 = vmul.f32 %v362, %v364
        %v367 = vadd.f32 %v366, 1e-07
        %v368 = vsub.f32 %v367, %v357
        %v369 = vrcp.pop %v367
        %v370 = vmul.f32 %v368, %v369
        %v371 = vsub.f32 %v359, %v370
        %v372 = vsub.f32 1.0, %v371
        %v373 = vmul.f32 %v372, %v303
        %vm374 = vcmask 1040384
        %v375 = vsel %vm374, %v373, 0.0
        %376 = vadd.xlane.f32.xlu0 %v375
        %v377 = vpop.xlane.xlu0 %376
        %v378 = vrot.slane %v377, 4
        %v379 = vadd.f32 %v377, %v378
        %v380 = vrot.slane %v379, 2
        %v381 = vadd.f32 %v379, %v380
        %v382 = vrot.slane %v381, 1
        %v383 = vadd.f32 %v381, %v382
        %s384 = vtos %v383
        %385 = sst [smem:[%s297]] %s384
      $region44: #{_detr_losses_all_layers.1} parent=39 // pred_fallthru
        _
      %v386 = vld [vmem:[%s273] sm:$0xff]
      %v387 = vld [vmem:[%s273 + $0x8] sm:$0xff]
      %v388 = vlaneseq
      %v389 = vand.u32 %v388, 127
      %v390 = vlaneseq
      %v391 = vshrl.u32 %v390, 7
      %v392 = vadd.s32 %v391, 8
      %s393 = smul.u32 %s37, 2
      %s394 = sadd.s32 %s393, %s38
      %s395 = smul.u32 %s394, 128
      %s396 = sld [smem:[#allocation5 + %s395]]
      %v397 = vstv %s396
      %vm398 = vcmp.eq.s32.totalorder %v391, %v397
      %vm399 = vcmp.eq.s32.totalorder %v392, %v397
      %s400 = smul.u32 %s38, 128
      %s401 = sld [smem:[#allocation6 + %s400]]
      %v402 = vstv %s401
      %v403 = vsel %vm398, %v402, 20
      %v404 = vsel %vm399, %v402, 20
      %s405 = sadd.s32 %s395, 1
      %s406 = sld [smem:[#allocation5 + %s405]]
      %v407 = vstv %s406
      %vm408 = vcmp.eq.s32.totalorder %v391, %v407
      %vm409 = vcmp.eq.s32.totalorder %v392, %v407
      %s410 = sadd.s32 %s400, 1
      %s411 = sld [smem:[#allocation6 + %s410]]
      %v412 = vstv %s411
      %v413 = vsel %vm408, %v412, %v403
      %v414 = vsel %vm409, %v412, %v404
      %s415 = sadd.s32 %s395, 2
      %s416 = sld [smem:[#allocation5 + %s415]]
      %v417 = vstv %s416
      %vm418 = vcmp.eq.s32.totalorder %v391, %v417
      %vm419 = vcmp.eq.s32.totalorder %v392, %v417
      %s420 = sadd.s32 %s400, 2
      %s421 = sld [smem:[#allocation6 + %s420]]
      %v422 = vstv %s421
      %v423 = vsel %vm418, %v422, %v413
      %v424 = vsel %vm419, %v422, %v414
      %s425 = sadd.s32 %s395, 3
      %s426 = sld [smem:[#allocation5 + %s425]]
      %v427 = vstv %s426
      %vm428 = vcmp.eq.s32.totalorder %v391, %v427
      %vm429 = vcmp.eq.s32.totalorder %v392, %v427
      %s430 = sadd.s32 %s400, 3
      %s431 = sld [smem:[#allocation6 + %s430]]
      %v432 = vstv %s431
      %v433 = vsel %vm428, %v432, %v423
      %v434 = vsel %vm429, %v432, %v424
      %vm435 = vcmp.eq.s32.totalorder %v389, %v433
      %vm436 = vcmp.eq.s32.totalorder %v389, %v434
      %vm437 = vcmask 171008
      %v438 = vsel %vm437, %v386, -inf
      %439 = vmax.xlane.f32.xlu0 %v438
      %v440 = vpop.xlane.xlu0 %439
      %v441 = vsel %vm437, %v387, -inf
      %442 = vmax.xlane.f32.xlu0 %v441
      %v443 = vpop.xlane.xlu0 %442
      %v444 = vsub.f32 %v386, %v440
      %v445 = vsub.f32 %v387, %v443
      %v446 = vmul.f32 %v444, 1.442695
      %v447 = vpow.pop %v446
      %v448 = vmul.f32 %v445, 1.442695
      %v449 = vpow.pop %v448
      %v450 = vsel %vm437, %v447, 0.0
      %451 = vadd.xlane.f32.xlu0 %v450
      %v452 = vpop.xlane.xlu0 %451
      %v453 = vsel %vm437, %v449, 0.0
      %454 = vadd.xlane.f32.xlu0 %v453
      %v455 = vpop.xlane.xlu0 %454
      %v456 = vlog2.pop %v452
      %v457 = vmul.f32 %v456, 0.6931472
      %v458 = vlog2.pop %v455
      %v459 = vmul.f32 %v458, 0.6931472
      %v460 = vadd.f32 %v457, %v440
      %v461 = vadd.f32 %v459, %v443
      %v462 = vsub.f32 %v460, %v386
      %v463 = vsub.f32 %v461, %v387
      %v464 = vsel %vm435, %v462, 0.0
      %v465 = vsel %vm436, %v463, 0.0
      %v466 = vsel %vm437, %v464, 0.0
      %467 = vadd.xlane.f32.xlu0 %v466
      %v468 = vpop.xlane.xlu0 %467
      %v469 = vsel %vm437, %v465, 0.0
      %470 = vadd.xlane.f32.xlu0 %v469
      %v471 = vpop.xlane.xlu0 %470
      %v472 = vld [vmem:[%s4] sm:$0x1]
      %v474 = vlaneseq
      %v475 = vshrl.u32 %v474, 7
      %v476 = vsub.s32 0, %v475
      %v477 = vrot.slane %v472, %v476
      %v479 = vsel %vm435, %v477, 0.0
      %v480 = vsel %vm436, %v477, 0.0
      %v481 = vsel %vm437, %v479, 0.0
      %482 = vadd.xlane.f32.xlu0 %v481
      %v483 = vpop.xlane.xlu0 %482
      %v484 = vsel %vm437, %v480, 0.0
      %485 = vadd.xlane.f32.xlu0 %v484
      %v486 = vpop.xlane.xlu0 %485
      %vm487 = vcmp.ge.f32.partialorder %v386, %v440
      %vm488 = vcmp.ge.f32.partialorder %v387, %v443
      %v489 = vsel %vm487, %v389, 21
      %v490 = vsel %vm488, %v389, 21
      %v491 = vsel %vm437, %v489, 2147483647
      %v492 = vand.u32 %v491, 65535
      %v493 = vshra.s32 %v491, 16
      %v494 = vcvt.s32.f32 %v492
      %v495 = vcvt.s32.f32 %v493
      %496 = vmin.xlane.f32.xlu0 %v495
      %v497 = vpop.xlane.xlu0 %496
      %vm498 = vcmp.eq.f32.partialorder %v495, %v497
      %v499 = vsel %vm498, %v494, inf
      %500 = vmin.xlane.f32.xlu0 %v499
      %v501 = vpop.xlane.xlu0 %500
      %v502 = vcvt.f32.s32 %v501
      %v503 = vcvt.f32.s32 %v497
      %v504 = vshll.u32 %v503, 16
      %v505 = vadd.s32 %v504, %v502
      %v506 = vsel %vm437, %v490, 2147483647
      %v507 = vand.u32 %v506, 65535
      %v508 = vshra.s32 %v506, 16
      %v509 = vcvt.s32.f32 %v507
      %v510 = vcvt.s32.f32 %v508
      %511 = vmin.xlane.f32.xlu0 %v510
      %v512 = vpop.xlane.xlu0 %511
      %vm513 = vcmp.eq.f32.partialorder %v510, %v512
      %v514 = vsel %vm513, %v509, inf
      %515 = vmin.xlane.f32.xlu0 %v514
      %v516 = vpop.xlane.xlu0 %515
      %v517 = vcvt.f32.s32 %v516
      %v518 = vcvt.f32.s32 %v512
      %v519 = vshll.u32 %v518, 16
      %v520 = vadd.s32 %v519, %v517
      %vm521 = vcmp.ne.s32.totalorder %v505, 20
      %vm522 = vcmp.ne.s32.totalorder %v520, 20
      %v523 = vsel %vm521, 1, 0
      %v524 = vsel %vm522, 1, 0
      %v525 = vcvt.s32.f32 %v523
      %v526 = vcvt.s32.f32 %v524
      %vm527 = vcmp.ne.s32.totalorder %v433, 20
      %vm528 = vcmp.ne.s32.totalorder %v434, 20
      %v529 = vsel %vm527, 1, 0
      %v530 = vsel %vm528, 1, 0
      %v531 = vcvt.s32.f32 %v529
      %v532 = vcvt.s32.f32 %v530
      %vm533 = vcmp.eq.s32.totalorder %v505, %v433
      %vm534 = vcmp.eq.s32.totalorder %v520, %v434
      %v535 = vsel %vm533, 1, 0
      %v536 = vsel %vm534, 1, 0
      %v537 = vcvt.s32.f32 %v535
      %v538 = vcvt.s32.f32 %v536
      %v539 = vmul.f32 %v531, %v537
      %v540 = vmul.f32 %v532, %v538
      %s541 = sld [smem:[#allocation2]]
      %v542 = vmul.f32 %v483, %v468
      %v543 = vmul.f32 %v486, %v471
      %vm544 = vcmask 7168
      %v545 = vsel %vm544, %v542, 0.0
      %v546 = vsel %vm544, %v543, 0.0
      %v547 = vadd.f32 %v545, %v546
      %548 = vadd.xlane.f32.xlu0 %v547
      %v549 = vpop.xlane.xlu0 %548
      %v550 = vrot.slane %v549, 4
      %v551 = vadd.f32 %v549, %v550
      %v552 = vrot.slane %v551, 2
      %v553 = vadd.f32 %v551, %v552
      %v554 = vrot.slane %v553, 1
      %v555 = vadd.f32 %v553, %v554
      %s556 = vtos %v555
      %s557 = sadd.f32 %s541, %s556
      %s558 = scalar_lea.smem [#allocation2], 0
      %559 = sst [smem:[%s558]] %s557
      %s560 = sld [smem:[#allocation2 + $0x1]]
      %v561 = vsel %vm544, %v483, 0.0
      %v562 = vsel %vm544, %v486, 0.0
      %v563 = vadd.f32 %v561, %v562
      %564 = vadd.xlane.f32.xlu0 %v563
      %v565 = vpop.xlane.xlu0 %564
      %v566 = vrot.slane %v565, 4
      %v567 = vadd.f32 %v565, %v566
      %v568 = vrot.slane %v567, 2
      %v569 = vadd.f32 %v567, %v568
      %v570 = vrot.slane %v569, 1
      %v571 = vadd.f32 %v569, %v570
      %s572 = vtos %v571
      %s573 = sadd.f32 %s560, %s572
      %s574 = scalar_lea.smem [#allocation2], 1
      %575 = sst [smem:[%s574]] %s573
      %s576 = sld [smem:[#allocation2 + $0x2]]
      %v577 = vsel %vm544, %v525, 0.0
      %v578 = vsel %vm544, %v526, 0.0
      %v579 = vadd.f32 %v577, %v578
      %580 = vadd.xlane.f32.xlu0 %v579
      %v581 = vpop.xlane.xlu0 %580
      %v582 = vrot.slane %v581, 4
      %v583 = vadd.f32 %v581, %v582
      %v584 = vrot.slane %v583, 2
      %v585 = vadd.f32 %v583, %v584
      %v586 = vrot.slane %v585, 1
      %v587 = vadd.f32 %v585, %v586
      %s588 = vtos %v587
      %s589 = sld [smem:[#allocation4 + %s38]]
      %s590 = scvt.s32.f32 %s589
      %s591 = ssub.f32 %s588, %s590
      %s592 = sand.u32 2147483647, %s591
      %s593 = sadd.f32 %s576, %s592
      %s594 = scalar_lea.smem [#allocation2], 2
      %595 = sst [smem:[%s594]] %s593
      %s596 = sld [smem:[#allocation2 + $0x3]]
      %v597 = vsel %vm544, %v539, 0.0
      %v598 = vsel %vm544, %v540, 0.0
      %v599 = vadd.f32 %v597, %v598
      %600 = vadd.xlane.f32.xlu0 %v599
      %v601 = vpop.xlane.xlu0 %600
      %v602 = vrot.slane %v601, 4
      %v603 = vadd.f32 %v601, %v602
      %v604 = vrot.slane %v603, 2
      %v605 = vadd.f32 %v603, %v604
      %v606 = vrot.slane %v605, 1
      %v607 = vadd.f32 %v605, %v606
      %s608 = vtos %v607
      %s609 = sadd.f32 %s596, %s608
      %s610 = scalar_lea.smem [#allocation2], 3
      %611 = sst [smem:[%s610]] %s609
      %s612 = sld [smem:[#allocation2 + $0x4]]
      %v613 = vsel %vm544, %v531, 0.0
      %v614 = vsel %vm544, %v532, 0.0
      %v615 = vadd.f32 %v613, %v614
      %616 = vadd.xlane.f32.xlu0 %v615
      %v617 = vpop.xlane.xlu0 %616
      %v618 = vrot.slane %v617, 4
      %v619 = vadd.f32 %v617, %v618
      %v620 = vrot.slane %v619, 2
      %v621 = vadd.f32 %v619, %v620
      %v622 = vrot.slane %v621, 1
      %v623 = vadd.f32 %v621, %v622
      %s624 = vtos %v623
      %s625 = sadd.f32 %s612, %s624
      %s626 = scalar_lea.smem [#allocation2], 4
      %627 = sst [smem:[%s626]] %s625
      %p628 = scmp.eq.s32.totalorder %s38, 1
      // Predicated region
      $region45: #{_detr_losses_all_layers.1} parent=39 // pred_check
        %p629 = pneg %p628
      $region46: #{_detr_losses_all_layers.1} parent=39 // pred_check_branch
        %631 = sbr.rel (%p629) target = $region48
      $region47: #{_detr_losses_all_layers.1} parent=39 // pred_region
        %s632 = sld [smem:[#allocation2]]
        %s633 = sld [smem:[#allocation2 + $0x1]]
        %v634 = vstv %s633
        %v635 = vrcp.pop %v634
        %s636 = vtos %v635
        %s637 = smul.f32 %s632, %s636
        %s638 = sld [smem:[#allocation2 + $0x2]]
        %s639 = smul.f32 %s638, 0.5
        %s640 = sld [smem:[#allocation2 + $0x3]]
        %s641 = smul.f32 %s640, 100.0
        %s642 = sld [smem:[#allocation2 + $0x4]]
        %s643 = smax.f32 %s642, 1.0
        %v644 = vstv %s643
        %v645 = vrcp.pop %v644
        %s646 = vtos %v645
        %s647 = smul.f32 %s641, %s646
        %s648 = ssub.f32 100.0, %s647
        %vm649 = vcmp.eq.s32.totalorder %v389, 0
        %v650 = vstv %s637
        %v651 = vsel %vm649, %v650, 0.0
        %vm652 = vcmp.eq.s32.totalorder %v389, 1
        %v653 = vstv %s639
        %v654 = vsel %vm652, %v653, 0.0
        %v655 = vadd.f32 %v651, %v654
        %vm656 = vcmp.eq.s32.totalorder %v389, 2
        %v657 = vstv %s648
        %v658 = vsel %vm656, %v657, 0.0
        %v659 = vadd.f32 %v655, %v658
        %vm660 = vcmp.eq.s32.totalorder %v389, 3
        %s661 = sld [smem:[#allocation2 + $0x5]]
        %v662 = vstv %s661
        %v663 = vsel %vm660, %v662, 0.0
        %v664 = vadd.f32 %v659, %v663
        %vm665 = vcmp.eq.s32.totalorder %v389, 4
        %s666 = sld [smem:[#allocation2 + $0x6]]
        %v667 = vstv %s666
        %v668 = vsel %vm665, %v667, 0.0
        %v669 = vadd.f32 %v664, %v668
        %vm670 = vcmask 57344
        %671 = vst.msk [vmem:[%s280] sm:$0x1] %vm670, %v669
      $region48: #{_detr_losses_all_layers.1} parent=39 // pred_fallthru
        _
      %p672 = scmp.lt.s32.totalorder %s37, 1
      %s673 = scalar_select %p672, %s37, 1
      %s674 = scalar_lea.vmem %s8, %s673
      // Predicated region
      $region49: #{_detr_losses_all_layers.1} parent=39 // pred_check
        %p675 = pneg %p180
      $region50: #{_detr_losses_all_layers.1} parent=39 // pred_check_branch
        %677 = sbr.rel (%p675) target = $region52
      $region51: #{_detr_losses_all_layers.1} parent=39 // pred_region
        _
      $region52: #{_detr_losses_all_layers.1} parent=39 // pred_fallthru
        _
    $region40: #{_detr_losses_all_layers.1} parent=5 // pred_fallthru
      _
    %p678 = scmp.le.s32.totalorder 2, %s28
    // Predicated region
    $region53: #{_detr_losses_all_layers.1} parent=5 // pred_check
      %p679 = pneg %p678
    $region54: #{_detr_losses_all_layers.1} parent=5 // pred_check_branch
      %681 = sbr.rel (%p679) target = $region56
    $region55: #{_detr_losses_all_layers.1} parent=5 // pred_region
      %s682 = ssub.s32 %s28, 2
      // Predicated region
      $region57: #{_detr_losses_all_layers.1} parent=55 // pred_check
        %p683 = pneg %p186
      $region58: #{_detr_losses_all_layers.1} parent=55 // pred_check_branch
        %685 = sbr.rel (%p683) target = $region60
      $region59: #{_detr_losses_all_layers.1} parent=55 // pred_region
        %p686 = scmp.lt.s32.totalorder %s39, 1
        %s687 = scalar_select %p686, %s39, 1
        %s688 = scalar_lea.vmem %s8, %s687
      $region60: #{_detr_losses_all_layers.1} parent=55 // pred_fallthru
        _
    $region56: #{_detr_losses_all_layers.1} parent=5 // pred_fallthru
      _
  $region6: #{_detr_losses_all_layers.1} parent=0 // loop_footer
    %s32 = sadd.s32 1, %s28
  $region7: #{_detr_losses_all_layers.1} parent=0 // loop_footer_branch
    %27 = sbr.rel target = $region3
  $region8: #{_detr_losses_all_layers.1} parent=0 // loop_exit
    _

</llo_original>
